<compile_context>
chip_gen: v7x
topology: tpu7x:2x2x1
jax: 0.10.0
libtpu: 0.0.40
codegen_flags: <defaults>
</compile_context>

<pallas_src>
import functools

import jax
import jax.numpy as jnp
from jax.experimental import pallas as pl
from jax.experimental.pallas import tpu as pltpu

EPS = 1e-5  # nn.LayerNorm default eps

# Row order of the packed [n_rows, width] f32 bias/gain slab.
_BIAS_ROWS = ('ln1_g', 'ln1_b', 'bl1', 'bl2', 'ln2_g', 'ln2_b', 'b1', 'b2', 'b3')
_BIAS_ROW = {n: i for i, n in enumerate(_BIAS_ROWS)}


def _round_up(x, m):
    return ((x + m - 1) // m) * m


def _wslab_layout(D, H, M, HID):
    """Row layout of the packed small-weight slab (all starts 8-row aligned)."""
    entries = (('wqkv', D, 3 * H), ('wc', H, D), ('wl1', D, M), ('wl2', M, D),
               ('w1_z', D, HID))
    layout, off, width = {}, 0, 0
    for name, r, c in entries:
        layout[name] = (off, r, c)
        off += _round_up(r, 8)
        width = max(width, c)
    return layout, _round_up(off, 8), _round_up(width, 128)


def _layernorm(x, gamma, beta):
    mean = jnp.mean(x, axis=-1, keepdims=True)
    var = jnp.mean(jnp.square(x - mean), axis=-1, keepdims=True)
    return (x - mean) * jax.lax.rsqrt(var + EPS) * gamma + beta


# ---------------------------------------------------------------------------
# Fused kernel: attention block (last position only) + head MLP.
# ---------------------------------------------------------------------------
def fused_kernel(x_ref, data_ref, wslab_ref, w1d_ref, w2_ref, w3_ref, bslab_ref,
                 o_ref, *, S, wl_layout):
    TBS, D = x_ref.shape               # x block: [TB*S, D] f32
    TB = TBS // S
    H = D // 2
    M = H * H
    HID = w2_ref.shape[0]
    f32 = jnp.float32
    bf16 = jnp.bfloat16

    def wpart(name):                   # static slice of the packed small-weight slab
        r0, nr, nc = wl_layout[name]
        return wslab_ref[r0:r0 + nr, :nc]

    def brow(name, width):             # static [1, width] row of the bias slab
        r = _BIAS_ROW[name]
        return bslab_ref[r:r + 1, :width]

    # --- fused Q/K/V projection: one dot, Q taken from the last-position rows -----
    x = x_ref[...]                                                   # [TB*S, D] f32
    qkv = jnp.dot(x, wpart('wqkv'), preferred_element_type=f32)      # [TB*S, 3H]
    qkv = qkv.reshape(TB, S, 3 * H)    # tiny vreg-resident value reshape (not the input)
    k = qkv[:, :, :H]                                                # [TB, S, H]
    v = qkv[:, :, H:2 * H]                                           # [TB, S, H]
    q = qkv[:, S - 1, 2 * H:]                                        # [TB, H]

    # --- attention scores for the last query, on the VPU (H=8 contraction) --------
    scores = jnp.sum(q[:, None, :] * k, axis=-1)                     # [TB, S]
    scores = scores - jnp.max(scores, axis=-1, keepdims=True)
    p = jnp.exp(scores)
    alpha = p * pl.reciprocal(jnp.sum(p, axis=-1, keepdims=True))    # exact reciprocal
    alpha_v = jnp.sum(alpha[:, :, None] * v, axis=1)                 # [TB, H]

    # --- output projection + residual + LayerNorm1 (last position only) -----------
    u_prime = jnp.dot(alpha_v, wpart('wc'), preferred_element_type=f32)   # [TB, D]
    x_last = x_ref[pl.ds(S - 1, TB, stride=S), :]    # strided gather of last rows
    u = _layernorm(x_last + u_prime, brow('ln1_g', D), brow('ln1_b', D))

    # --- LRL MLP + residual + LayerNorm2 -------------------------------------------
    h_mid = jnp.maximum(
        jnp.dot(u, wpart('wl1'), preferred_element_type=f32) + brow('bl1', M), 0.0)
    z_prime = jnp.dot(h_mid, wpart('wl2'), preferred_element_type=f32) + brow('bl2', D)
    z = _layernorm(z_prime + u, brow('ln2_g', D), brow('ln2_b', D))  # [TB, D] == z[:, -1]

    # --- head MLP; concat([data, z]) replaced by split first-layer weight ----------
    # Dropout layers are identity in eval mode.  bf16 MXU operands, f32 accumulate.
    dat = data_ref[...]                                              # [TB, DATA] bf16
    h1 = jnp.maximum(
        jnp.dot(dat, w1d_ref[...], preferred_element_type=f32)
        + jnp.dot(z, wpart('w1_z'), preferred_element_type=f32)
        + brow('b1', HID), 0.0)                                      # [TB, HID]
    h2 = jnp.maximum(
        jnp.dot(h1.astype(bf16), w2_ref[...], preferred_element_type=f32)
        + brow('b2', HID), 0.0)                                      # [TB, HID]
    # Lane-dense [TB, 128] store; padded columns are sliced off outside the kernel.
    o_ref[...] = (jnp.dot(h2.astype(bf16), w3_ref[...], preferred_element_type=f32)
                  + brow('b3', o_ref.shape[1]))


# ---------------------------------------------------------------------------
# Wrapper
# ---------------------------------------------------------------------------
def fused_forward_pallas(h_sequence, data, kp):
    B, S, D = h_sequence.shape
    H = D // 2
    M = H * H
    HID = kp['w2'].shape[0]
    DATA = data.shape[1]
    OUT_W = kp['w3p'].shape[1]

    # Free in XLA (row-major metadata only); avoids an in-kernel reshape/relayout.
    x_flat = h_sequence.reshape(B * S, D).astype(jnp.float32)
    data_b16 = data.astype(jnp.bfloat16)

    wl_layout, _, _ = _wslab_layout(D, H, M, HID)
    kernel = functools.partial(fused_kernel, S=S, wl_layout=wl_layout)

    TB = min(B, 256)                       # batch tile (well under scoped VMEM everywhere)
    grid = (pl.cdiv(B, TB),)
    const = lambda i: (0, 0)               # weights stay VMEM-resident across the grid

    flops = int(2 * B * S * D * 3 * H + 4 * B * S * H + 2 * B * H * D + 4 * B * D * M
                + 2 * B * (DATA + D) * HID + 2 * B * HID * HID + 2 * B * HID * OUT_W)
    bytes_accessed = int(
        x_flat.size * 4 + data_b16.size * 2 + kp['wslab'].size * 4
        + kp['w1_data'].size * 2 + kp['w2'].size * 2 + kp['w3p'].size * 2
        + kp['bslab'].size * 4 + B * OUT_W * 4)
    cost = pl.CostEstimate(flops=flops, transcendentals=int(B * S + 2 * B),
                           bytes_accessed=bytes_accessed)

    out = pl.pallas_call(
        kernel,
        out_shape=jax.ShapeDtypeStruct((B, OUT_W), jnp.float32),
        grid=grid,
        in_specs=[
            pl.BlockSpec((TB * S, D), lambda i: (i, 0)),          # x_flat
            pl.BlockSpec((TB, DATA), lambda i: (i, 0)),           # data (bf16)
            pl.BlockSpec(kp['wslab'].shape, const),               # small-weight slab
            pl.BlockSpec(kp['w1_data'].shape, const),             # [DATA, HID] bf16
            pl.BlockSpec(kp['w2'].shape, const),                  # [HID, HID] bf16
            pl.BlockSpec(kp['w3p'].shape, const),                 # [HID, 128] bf16
            pl.BlockSpec(kp['bslab'].shape, const),               # bias slab f32
        ],
        out_specs=pl.BlockSpec((TB, OUT_W), lambda i: (i, 0)),
        compiler_params=pltpu.CompilerParams(dimension_semantics=("parallel",)),
        cost_estimate=cost,
    )(x_flat, data_b16, kp['wslab'], kp['w1_data'], kp['w2'], kp['w3p'], kp['bslab'])
    return out


@functools.partial(jax.jit, static_argnames=('dim_logits',))
def attend_approximator_forward(h_sequence, data, kernel_params, *, dim_logits):
    out = fused_forward_pallas(h_sequence, data, kernel_params)
    return out[:, :dim_logits]


def prepare_kernel_params(p, data_dim):
    """One-time weight re-packing for the fused kernel (done outside the kernel)."""
    D, H = p['wq'].shape
    M = p['wl1'].shape[1]
    HID = p['w2'].shape[0]
    L = p['w3'].shape[1]
    OUT_W = _round_up(L, 128)

    # Packed small-weight slab (f32): wqkv=[wk|wv|wq], wc, wl1, wl2, w1_z.
    wl_layout, wrows, wwidth = _wslab_layout(D, H, M, HID)
    wslab = jnp.zeros((wrows, wwidth), jnp.float32)
    small = {
        'wqkv': jnp.concatenate([p['wk'], p['wv'], p['wq']], axis=1),
        'wc': p['wc'],
        'wl1': p['wl1'],
        'wl2': p['wl2'],
        'w1_z': p['w1'][data_dim:, :],
    }
    for name, w in small.items():
        r0, nr, nc = wl_layout[name]
        wslab = wslab.at[r0:r0 + nr, :nc].set(w.astype(jnp.float32))

    # Packed bias/gain slab (f32), one row per vector; b3 zero-padded to OUT_W lanes.
    bwidth = _round_up(max(D, M, HID, OUT_W), 128)
    bslab = jnp.zeros((len(_BIAS_ROWS), bwidth), jnp.float32)
    vecs = {'ln1_g': p['ln1_g'], 'ln1_b': p['ln1_b'], 'bl1': p['bl1'], 'bl2': p['bl2'],
            'ln2_g': p['ln2_g'], 'ln2_b': p['ln2_b'], 'b1': p['b1'], 'b2': p['b2'],
            'b3': p['b3']}
    for name, v in vecs.items():
        v = v.reshape(-1)
        bslab = bslab.at[_BIAS_ROW[name], :v.shape[0]].set(v.astype(jnp.float32))

    # Lane-dense, bf16 head weights.
    w3p = jnp.zeros((HID, OUT_W), jnp.float32).at[:, :L].set(p['w3']).astype(jnp.bfloat16)
    return {
        'wslab': wslab,
        'w1_data': p['w1'][:data_dim, :].astype(jnp.bfloat16),
        'w2': p['w2'].astype(jnp.bfloat16),
        'w3p': w3p,
        'bslab': bslab,
    }


# ---------------------------------------------------------------------------
# Pure-JAX reference (full original math, exact softmax, f32) for correctness.
# ---------------------------------------------------------------------------
def reference_forward(h_sequence, data, p):
    x = h_sequence.astype(jnp.float32)
    q = x @ p['wq']; k = x @ p['wk']; v = x @ p['wv']
    scores = jnp.einsum('bqh,bkh->bqk', q, k)
    alpha = jax.nn.softmax(scores, axis=-1)
    u = _layernorm(x + jnp.einsum('bqk,bkh->bqh', alpha, v) @ p['wc'],
                   p['ln1_g'], p['ln1_b'])
    z_prime = jnp.maximum(u @ p['wl1'] + p['bl1'], 0.0) @ p['wl2'] + p['bl2']
    z = _layernorm(z_prime + u, p['ln2_g'], p['ln2_b'])[:, -1]
    xx = jnp.concatenate([data, z], axis=1)
    h1 = jnp.maximum(xx @ p['w1'] + p['b1'], 0.0)
    h2 = jnp.maximum(h1 @ p['w2'] + p['b2'], 0.0)
    return h2 @ p['w3'] + p['b3']


# ---------------------------------------------------------------------------
# Deterministic parameter init (synthetic; matches module __init__ shapes)
# ---------------------------------------------------------------------------
def init_params(key, arch_dim, data_dim, dim_logits, hidden_dim):
    d = arch_dim
    h = arch_dim // 2
    m = h ** 2
    keys = jax.random.split(key, 12)

    def lin(k, fi, fo):
        return (jax.random.normal(k, (fi, fo), jnp.float32) / jnp.sqrt(fi)).astype(jnp.float32)

    params = {
        'wq': lin(keys[0], d, h), 'wk': lin(keys[1], d, h), 'wv': lin(keys[2], d, h),
        'wc': lin(keys[3], h, d),
        'ln1_g': jnp.ones((1, d), jnp.float32), 'ln1_b': jnp.zeros((1, d), jnp.float32),
        'wl1': lin(keys[4], d, m), 'bl1': 0.01 * jax.random.normal(keys[5], (1, m), jnp.float32),
        'wl2': lin(keys[6], m, d), 'bl2': 0.01 * jax.random.normal(keys[7], (1, d), jnp.float32),
        'ln2_g': jnp.ones((1, d), jnp.float32), 'ln2_b': jnp.zeros((1, d), jnp.float32),
    }
    # dim_logits // 100 == 0 branch of self.model (hidden_dim sized head)
    params.update({
        'w1': lin(keys[8], arch_dim + data_dim, hidden_dim),
        'b1': 0.01 * jax.random.normal(keys[9], (1, hidden_dim), jnp.float32),
        'w2': lin(keys[10], hidden_dim, hidden_dim),
        'b2': jnp.zeros((1, hidden_dim), jnp.float32),
        'w3': lin(keys[11], hidden_dim, dim_logits),
        'b3': jnp.zeros((1, dim_logits), jnp.float32),
    })
    return params


if __name__ == "__main__":
    # Small shapes consistent with the module's forward (DATA_DIM lane-aligned: 2 x 128)
    B, S = 2, 8
    ARCH_DIM, DATA_DIM, DIM_LOGITS, HIDDEN_DIM = 16, 256, 10, 64

    key = jax.random.PRNGKey(0)
    k_param, k_seq, k_data = jax.random.split(key, 3)

    params = init_params(k_param, ARCH_DIM, DATA_DIM, DIM_LOGITS, HIDDEN_DIM)
    kparams = prepare_kernel_params(params, DATA_DIM)

    h_sequence = jax.random.normal(k_seq, (B, S, ARCH_DIM), jnp.float32)
    data = jax.random.normal(k_data, (B, DATA_DIM), jnp.float32)

    logits = attend_approximator_forward(h_sequence, data, kparams, dim_logits=DIM_LOGITS)
    logits = jax.block_until_ready(logits)

    ref = reference_forward(h_sequence, data, params)
    assert logits.shape == (B, DIM_LOGITS), logits.shape
    # Tolerance accounts for bf16 MXU inputs on the head-MLP dots (attention path is f32).
    err = jnp.max(jnp.abs(logits - ref))
    assert jnp.allclose(logits, ref, rtol=5e-2, atol=5e-2), f"max abs err {err}"

    print("KERNEL_OK")
</pallas_src>

<mosaic_0001>
module attributes {stable_mosaic.version = 11 : i64} {
  func.func @fused_kernel(%arg0: i32, %arg1: memref<16x16xf32, #tpu.memory_space<vmem>>, %arg2: memref<2x256xbf16, #tpu.memory_space<vmem>>, %arg3: memref<120x128xf32, #tpu.memory_space<vmem>>, %arg4: memref<256x64xbf16, #tpu.memory_space<vmem>>, %arg5: memref<64x64xbf16, #tpu.memory_space<vmem>>, %arg6: memref<64x128xbf16, #tpu.memory_space<vmem>>, %arg7: memref<9x128xf32, #tpu.memory_space<vmem>>, %arg8: memref<2x128xf32, #tpu.memory_space<vmem>>) attributes {dimension_semantics = [#tpu.dimension_semantics<parallel>], iteration_bounds = array<i64: 1>, scalar_prefetch = 0 : i64, scratch_operands = 0 : i64, tpu.core_type = #tpu.core_type<tc>, window_params = [{transform_indices = @transform_0, window_bounds = array<i64: 16, 16>}, {transform_indices = @transform_1, window_bounds = array<i64: 2, 256>}, {pipeline_mode = #tpu.pipeline_mode<synchronous>, transform_indices = @transform_2, window_bounds = array<i64: 120, 128>}, {pipeline_mode = #tpu.pipeline_mode<synchronous>, transform_indices = @transform_3, window_bounds = array<i64: 256, 64>}, {pipeline_mode = #tpu.pipeline_mode<synchronous>, transform_indices = @transform_4, window_bounds = array<i64: 64, 64>}, {pipeline_mode = #tpu.pipeline_mode<synchronous>, transform_indices = @transform_5, window_bounds = array<i64: 64, 128>}, {pipeline_mode = #tpu.pipeline_mode<synchronous>, transform_indices = @transform_6, window_bounds = array<i64: 9, 128>}, {transform_indices = @transform_7, window_bounds = array<i64: 2, 128>}]} {
    %c0 = arith.constant 0 : index
    %c0_0 = arith.constant 0 : index
    %0 = vector.load %arg1[%c0, %c0_0] : memref<16x16xf32, #tpu.memory_space<vmem>>, vector<16x16xf32>
    %c0_1 = arith.constant 0 : index
    %c0_2 = arith.constant 0 : index
    %1 = vector.load %arg3[%c0_1, %c0_2] : memref<120x128xf32, #tpu.memory_space<vmem>>, vector<16x24xf32>
    %cst = arith.constant dense<0.000000e+00> : vector<16x24xf32>
    %2 = tpu.matmul %0, %1, %cst {dimension_numbers = #tpu.dot_dimension_numbers<[1], [0], [0], [1], [0, 0, 1, 1], [], []>} : vector<16x16xf32>, vector<16x24xf32>, vector<16x24xf32> -> vector<16x24xf32>
    %3 = vector.shape_cast %2 : vector<16x24xf32> to vector<2x8x24xf32>
    %4 = vector.extract_strided_slice %3 {offsets = [0, 0, 0], sizes = [2, 8, 8], strides = [1, 1, 1]} : vector<2x8x24xf32> to vector<2x8x8xf32>
    %5 = vector.extract_strided_slice %3 {offsets = [0, 0, 8], sizes = [2, 8, 8], strides = [1, 1, 1]} : vector<2x8x24xf32> to vector<2x8x8xf32>
    %6 = vector.extract_strided_slice %3 {offsets = [0, 7, 16], sizes = [2, 1, 8], strides = [1, 1, 1]} : vector<2x8x24xf32> to vector<2x1x8xf32>
    %7 = vector.shape_cast %6 : vector<2x1x8xf32> to vector<2x8xf32>
    %8 = vector.shape_cast %7 : vector<2x8xf32> to vector<2x1x8xf32>
    %9 = vector.broadcast %8 : vector<2x1x8xf32> to vector<2x8x8xf32>
    %10 = arith.mulf %9, %4 : vector<2x8x8xf32>
    %cst_3 = arith.constant dense<0.000000e+00> : vector<2x8xf32>
    %11 = vector.multi_reduction <add>, %10, %cst_3 [2] : vector<2x8x8xf32> to vector<2x8xf32>
    %cst_4 = arith.constant dense<0xFF800000> : vector<2xf32>
    %12 = vector.multi_reduction <maximumf>, %11, %cst_4 [1] : vector<2x8xf32> to vector<2xf32>
    %13 = vector.shape_cast %12 : vector<2xf32> to vector<2x1xf32>
    %14 = vector.broadcast %13 : vector<2x1xf32> to vector<2x8xf32>
    %15 = arith.subf %11, %14 : vector<2x8xf32>
    %16 = math.exp %15 : vector<2x8xf32>
    %cst_5 = arith.constant dense<0.000000e+00> : vector<2xf32>
    %17 = vector.multi_reduction <add>, %16, %cst_5 [1] : vector<2x8xf32> to vector<2xf32>
    %18 = vector.shape_cast %17 : vector<2xf32> to vector<2x1xf32>
    %19 = tpu.reciprocal %18 : vector<2x1xf32> -> vector<2x1xf32>
    %20 = vector.broadcast %19 : vector<2x1xf32> to vector<2x8xf32>
    %21 = arith.mulf %16, %20 : vector<2x8xf32>
    %22 = vector.shape_cast %21 : vector<2x8xf32> to vector<2x8x1xf32>
    %23 = vector.broadcast %22 : vector<2x8x1xf32> to vector<2x8x8xf32>
    %24 = arith.mulf %23, %5 : vector<2x8x8xf32>
    %cst_6 = arith.constant dense<0.000000e+00> : vector<2x8xf32>
    %25 = vector.multi_reduction <add>, %24, %cst_6 [1] : vector<2x8x8xf32> to vector<2x8xf32>
    %c16 = arith.constant 16 : index
    %c0_7 = arith.constant 0 : index
    %26 = vector.load %arg3[%c16, %c0_7] : memref<120x128xf32, #tpu.memory_space<vmem>>, vector<8x16xf32>
    %cst_8 = arith.constant dense<0.000000e+00> : vector<2x16xf32>
    %27 = tpu.matmul %25, %26, %cst_8 {dimension_numbers = #tpu.dot_dimension_numbers<[1], [0], [0], [1], [0, 0, 1, 1], [], []>} : vector<2x8xf32>, vector<8x16xf32>, vector<2x16xf32> -> vector<2x16xf32>
    %c7 = arith.constant 7 : index
    %c0_9 = arith.constant 0 : index
    %28 = tpu.strided_load %arg1[%c7, %c0_9] {strides = array<i32: 8, 1>} : memref<16x16xf32, #tpu.memory_space<vmem>>, vector<2x16xf32>
    %29 = arith.addf %28, %27 : vector<2x16xf32>
    %c0_10 = arith.constant 0 : index
    %c0_11 = arith.constant 0 : index
    %30 = vector.load %arg7[%c0_10, %c0_11] : memref<9x128xf32, #tpu.memory_space<vmem>>, vector<1x16xf32>
    %c1 = arith.constant 1 : index
    %c0_12 = arith.constant 0 : index
    %31 = vector.load %arg7[%c1, %c0_12] : memref<9x128xf32, #tpu.memory_space<vmem>>, vector<1x16xf32>
    %cst_13 = arith.constant dense<0.000000e+00> : vector<2xf32>
    %32 = vector.multi_reduction <add>, %29, %cst_13 [1] : vector<2x16xf32> to vector<2xf32>
    %33 = vector.shape_cast %32 : vector<2xf32> to vector<2x1xf32>
    %cst_14 = arith.constant 1.600000e+01 : f32
    %34 = vector.broadcast %cst_14 : f32 to vector<2x1xf32>
    %35 = arith.divf %33, %34 : vector<2x1xf32>
    %36 = vector.broadcast %35 : vector<2x1xf32> to vector<2x16xf32>
    %37 = arith.subf %29, %36 : vector<2x16xf32>
    %38 = arith.mulf %37, %37 : vector<2x16xf32>
    %cst_15 = arith.constant dense<0.000000e+00> : vector<2xf32>
    %39 = vector.multi_reduction <add>, %38, %cst_15 [1] : vector<2x16xf32> to vector<2xf32>
    %40 = vector.shape_cast %39 : vector<2xf32> to vector<2x1xf32>
    %cst_16 = arith.constant 1.600000e+01 : f32
    %41 = vector.broadcast %cst_16 : f32 to vector<2x1xf32>
    %42 = arith.divf %40, %41 : vector<2x1xf32>
    %43 = vector.broadcast %35 : vector<2x1xf32> to vector<2x16xf32>
    %44 = arith.subf %29, %43 : vector<2x16xf32>
    %cst_17 = arith.constant 9.99999974E-6 : f32
    %45 = vector.broadcast %cst_17 : f32 to vector<2x1xf32>
    %46 = arith.addf %42, %45 : vector<2x1xf32>
    %47 = math.rsqrt %46 : vector<2x1xf32>
    %48 = vector.broadcast %47 : vector<2x1xf32> to vector<2x16xf32>
    %49 = arith.mulf %44, %48 : vector<2x16xf32>
    %50 = vector.broadcast %30 : vector<1x16xf32> to vector<2x16xf32>
    %51 = arith.mulf %49, %50 : vector<2x16xf32>
    %52 = vector.broadcast %31 : vector<1x16xf32> to vector<2x16xf32>
    %53 = arith.addf %51, %52 : vector<2x16xf32>
    %c24 = arith.constant 24 : index
    %c0_18 = arith.constant 0 : index
    %54 = vector.load %arg3[%c24, %c0_18] : memref<120x128xf32, #tpu.memory_space<vmem>>, vector<16x64xf32>
    %cst_19 = arith.constant dense<0.000000e+00> : vector<2x64xf32>
    %55 = tpu.matmul %53, %54, %cst_19 {dimension_numbers = #tpu.dot_dimension_numbers<[1], [0], [0], [1], [0, 0, 1, 1], [], []>} : vector<2x16xf32>, vector<16x64xf32>, vector<2x64xf32> -> vector<2x64xf32>
    %c2 = arith.constant 2 : index
    %c0_20 = arith.constant 0 : index
    %56 = vector.load %arg7[%c2, %c0_20] : memref<9x128xf32, #tpu.memory_space<vmem>>, vector<1x64xf32>
    %57 = vector.broadcast %56 : vector<1x64xf32> to vector<2x64xf32>
    %58 = arith.addf %55, %57 : vector<2x64xf32>
    %cst_21 = arith.constant 0.000000e+00 : f32
    %59 = vector.broadcast %cst_21 : f32 to vector<2x64xf32>
    %60 = arith.maximumf %58, %59 : vector<2x64xf32>
    %c40 = arith.constant 40 : index
    %c0_22 = arith.constant 0 : index
    %61 = vector.load %arg3[%c40, %c0_22] : memref<120x128xf32, #tpu.memory_space<vmem>>, vector<64x16xf32>
    %cst_23 = arith.constant dense<0.000000e+00> : vector<2x16xf32>
    %62 = tpu.matmul %60, %61, %cst_23 {dimension_numbers = #tpu.dot_dimension_numbers<[1], [0], [0], [1], [0, 0, 1, 1], [], []>} : vector<2x64xf32>, vector<64x16xf32>, vector<2x16xf32> -> vector<2x16xf32>
    %c3 = arith.constant 3 : index
    %c0_24 = arith.constant 0 : index
    %63 = vector.load %arg7[%c3, %c0_24] : memref<9x128xf32, #tpu.memory_space<vmem>>, vector<1x16xf32>
    %64 = vector.broadcast %63 : vector<1x16xf32> to vector<2x16xf32>
    %65 = arith.addf %62, %64 : vector<2x16xf32>
    %66 = arith.addf %65, %53 : vector<2x16xf32>
    %c4 = arith.constant 4 : index
    %c0_25 = arith.constant 0 : index
    %67 = vector.load %arg7[%c4, %c0_25] : memref<9x128xf32, #tpu.memory_space<vmem>>, vector<1x16xf32>
    %c5 = arith.constant 5 : index
    %c0_26 = arith.constant 0 : index
    %68 = vector.load %arg7[%c5, %c0_26] : memref<9x128xf32, #tpu.memory_space<vmem>>, vector<1x16xf32>
    %cst_27 = arith.constant dense<0.000000e+00> : vector<2xf32>
    %69 = vector.multi_reduction <add>, %66, %cst_27 [1] : vector<2x16xf32> to vector<2xf32>
    %70 = vector.shape_cast %69 : vector<2xf32> to vector<2x1xf32>
    %cst_28 = arith.constant 1.600000e+01 : f32
    %71 = vector.broadcast %cst_28 : f32 to vector<2x1xf32>
    %72 = arith.divf %70, %71 : vector<2x1xf32>
    %73 = vector.broadcast %72 : vector<2x1xf32> to vector<2x16xf32>
    %74 = arith.subf %66, %73 : vector<2x16xf32>
    %75 = arith.mulf %74, %74 : vector<2x16xf32>
    %cst_29 = arith.constant dense<0.000000e+00> : vector<2xf32>
    %76 = vector.multi_reduction <add>, %75, %cst_29 [1] : vector<2x16xf32> to vector<2xf32>
    %77 = vector.shape_cast %76 : vector<2xf32> to vector<2x1xf32>
    %cst_30 = arith.constant 1.600000e+01 : f32
    %78 = vector.broadcast %cst_30 : f32 to vector<2x1xf32>
    %79 = arith.divf %77, %78 : vector<2x1xf32>
    %80 = vector.broadcast %72 : vector<2x1xf32> to vector<2x16xf32>
    %81 = arith.subf %66, %80 : vector<2x16xf32>
    %cst_31 = arith.constant 9.99999974E-6 : f32
    %82 = vector.broadcast %cst_31 : f32 to vector<2x1xf32>
    %83 = arith.addf %79, %82 : vector<2x1xf32>
    %84 = math.rsqrt %83 : vector<2x1xf32>
    %85 = vector.broadcast %84 : vector<2x1xf32> to vector<2x16xf32>
    %86 = arith.mulf %81, %85 : vector<2x16xf32>
    %87 = vector.broadcast %67 : vector<1x16xf32> to vector<2x16xf32>
    %88 = arith.mulf %86, %87 : vector<2x16xf32>
    %89 = vector.broadcast %68 : vector<1x16xf32> to vector<2x16xf32>
    %90 = arith.addf %88, %89 : vector<2x16xf32>
    %c0_32 = arith.constant 0 : index
    %c0_33 = arith.constant 0 : index
    %91 = vector.load %arg2[%c0_32, %c0_33] : memref<2x256xbf16, #tpu.memory_space<vmem>>, vector<2x256xbf16>
    %c0_34 = arith.constant 0 : index
    %c0_35 = arith.constant 0 : index
    %92 = vector.load %arg4[%c0_34, %c0_35] : memref<256x64xbf16, #tpu.memory_space<vmem>>, vector<256x64xbf16>
    %cst_36 = arith.constant dense<0.000000e+00> : vector<2x64xf32>
    %93 = tpu.matmul %91, %92, %cst_36 {dimension_numbers = #tpu.dot_dimension_numbers<[1], [0], [0], [1], [0, 0, 1, 1], [], []>} : vector<2x256xbf16>, vector<256x64xbf16>, vector<2x64xf32> -> vector<2x64xf32>
    %c104 = arith.constant 104 : index
    %c0_37 = arith.constant 0 : index
    %94 = vector.load %arg3[%c104, %c0_37] : memref<120x128xf32, #tpu.memory_space<vmem>>, vector<16x64xf32>
    %cst_38 = arith.constant dense<0.000000e+00> : vector<2x64xf32>
    %95 = tpu.matmul %90, %94, %cst_38 {dimension_numbers = #tpu.dot_dimension_numbers<[1], [0], [0], [1], [0, 0, 1, 1], [], []>} : vector<2x16xf32>, vector<16x64xf32>, vector<2x64xf32> -> vector<2x64xf32>
    %96 = arith.addf %93, %95 : vector<2x64xf32>
    %c6 = arith.constant 6 : index
    %c0_39 = arith.constant 0 : index
    %97 = vector.load %arg7[%c6, %c0_39] : memref<9x128xf32, #tpu.memory_space<vmem>>, vector<1x64xf32>
    %98 = vector.broadcast %97 : vector<1x64xf32> to vector<2x64xf32>
    %99 = arith.addf %96, %98 : vector<2x64xf32>
    %cst_40 = arith.constant 0.000000e+00 : f32
    %100 = vector.broadcast %cst_40 : f32 to vector<2x64xf32>
    %101 = arith.maximumf %99, %100 : vector<2x64xf32>
    %102 = arith.truncf %101 : vector<2x64xf32> to vector<2x64xbf16>
    %c0_41 = arith.constant 0 : index
    %c0_42 = arith.constant 0 : index
    %103 = vector.load %arg5[%c0_41, %c0_42] : memref<64x64xbf16, #tpu.memory_space<vmem>>, vector<64x64xbf16>
    %cst_43 = arith.constant dense<0.000000e+00> : vector<2x64xf32>
    %104 = tpu.matmul %102, %103, %cst_43 {dimension_numbers = #tpu.dot_dimension_numbers<[1], [0], [0], [1], [0, 0, 1, 1], [], []>} : vector<2x64xbf16>, vector<64x64xbf16>, vector<2x64xf32> -> vector<2x64xf32>
    %c7_44 = arith.constant 7 : index
    %c0_45 = arith.constant 0 : index
    %105 = vector.load %arg7[%c7_44, %c0_45] : memref<9x128xf32, #tpu.memory_space<vmem>>, vector<1x64xf32>
    %106 = vector.broadcast %105 : vector<1x64xf32> to vector<2x64xf32>
    %107 = arith.addf %104, %106 : vector<2x64xf32>
    %cst_46 = arith.constant 0.000000e+00 : f32
    %108 = vector.broadcast %cst_46 : f32 to vector<2x64xf32>
    %109 = arith.maximumf %107, %108 : vector<2x64xf32>
    %110 = arith.truncf %109 : vector<2x64xf32> to vector<2x64xbf16>
    %c0_47 = arith.constant 0 : index
    %c0_48 = arith.constant 0 : index
    %111 = vector.load %arg6[%c0_47, %c0_48] : memref<64x128xbf16, #tpu.memory_space<vmem>>, vector<64x128xbf16>
    %cst_49 = arith.constant dense<0.000000e+00> : vector<2x128xf32>
    %112 = tpu.matmul %110, %111, %cst_49 {dimension_numbers = #tpu.dot_dimension_numbers<[1], [0], [0], [1], [0, 0, 1, 1], [], []>} : vector<2x64xbf16>, vector<64x128xbf16>, vector<2x128xf32> -> vector<2x128xf32>
    %c8 = arith.constant 8 : index
    %c0_50 = arith.constant 0 : index
    %113 = vector.load %arg7[%c8, %c0_50] : memref<9x128xf32, #tpu.memory_space<vmem>>, vector<1x128xf32>
    %114 = vector.broadcast %113 : vector<1x128xf32> to vector<2x128xf32>
    %115 = arith.addf %112, %114 : vector<2x128xf32>
    %c0_51 = arith.constant 0 : index
    %c0_52 = arith.constant 0 : index
    %116 = vector.load %arg8[%c0_51, %c0_52] : memref<2x128xf32, #tpu.memory_space<vmem>>, vector<2x128xf32>
    tpu.vector_store %arg8[%c0_51, %c0_52], %115 {strides = array<i32>} : memref<2x128xf32, #tpu.memory_space<vmem>>, vector<2x128xf32>,
    return
  }
  func.func @transform_0(%arg0: i32) -> (i32, i32) {
    %c0_i32 = arith.constant 0 : i32
    %c0_i32_0 = arith.constant 0 : i32
    return %arg0, %c0_i32 : i32, i32
  }
  func.func @transform_1(%arg0: i32) -> (i32, i32) {
    %c0_i32 = arith.constant 0 : i32
    %c0_i32_0 = arith.constant 0 : i32
    return %arg0, %c0_i32 : i32, i32
  }
  func.func @transform_2(%arg0: i32) -> (i32, i32) {
    %c0_i32 = arith.constant 0 : i32
    %c0_i32_0 = arith.constant 0 : i32
    %c0_i32_1 = arith.constant 0 : i32
    return %c0_i32, %c0_i32_0 : i32, i32
  }
  func.func @transform_3(%arg0: i32) -> (i32, i32) {
    %c0_i32 = arith.constant 0 : i32
    %c0_i32_0 = arith.constant 0 : i32
    %c0_i32_1 = arith.constant 0 : i32
    return %c0_i32, %c0_i32_0 : i32, i32
  }
  func.func @transform_4(%arg0: i32) -> (i32, i32) {
    %c0_i32 = arith.constant 0 : i32
    %c0_i32_0 = arith.constant 0 : i32
    %c0_i32_1 = arith.constant 0 : i32
    return %c0_i32, %c0_i32_0 : i32, i32
  }
  func.func @transform_5(%arg0: i32) -> (i32, i32) {
    %c0_i32 = arith.constant 0 : i32
    %c0_i32_0 = arith.constant 0 : i32
    %c0_i32_1 = arith.constant 0 : i32
    return %c0_i32, %c0_i32_0 : i32, i32
  }
  func.func @transform_6(%arg0: i32) -> (i32, i32) {
    %c0_i32 = arith.constant 0 : i32
    %c0_i32_0 = arith.constant 0 : i32
    %c0_i32_1 = arith.constant 0 : i32
    return %c0_i32, %c0_i32_0 : i32, i32
  }
  func.func @transform_7(%arg0: i32) -> (i32, i32) {
    %c0_i32 = arith.constant 0 : i32
    %c0_i32_0 = arith.constant 0 : i32
    return %arg0, %c0_i32 : i32, i32
  }
}

</mosaic_0001>

<llo_original>
// kernel: attend_approximator_forward.1
$region0: #{attend_approximator_forward.1}
  #allocation0 [shape = 'u32[]', space=smem, size = 0x4, offset = 0x4, fixed_abs, tag = 'smem constant byte address 0x4 - core index']
  #allocation1 [shape = 'u32[144,128]{1,0:T(1,128)}', space=vmem, size = 0x12000, scoped, tag = 'internal scratch']
  %s0 = inlined_call_operand.vmem [shape: f32[16,16], index: 0, kind: input, shape index: {}]
  %s1 = inlined_call_operand.vmem [shape: bf16[2,256], index: 1, kind: input, shape index: {}]
  %s2 = inlined_call_operand.vmem [shape: f32[120,128], index: 2, kind: input, shape index: {}]
  %s3 = inlined_call_operand.vmem [shape: bf16[256,64], index: 3, kind: input, shape index: {}]
  %s4 = inlined_call_operand.vmem [shape: bf16[64,64], index: 4, kind: input, shape index: {}]
  %s5 = inlined_call_operand.vmem [shape: bf16[64,128], index: 5, kind: input, shape index: {}]
  %s6 = inlined_call_operand.vmem [shape: f32[9,128], index: 6, kind: input, shape index: {}]
  %s7 = inlined_call_operand.hbm [shape: f32[2,128], index: 7, kind: output, shape index: {}]
  %s8 = sld [smem:[#allocation0]]
  $region38: #{attend_approximator_forward.1} parent=0
    _
  %s10 = ssub.s32 1, %s8
  %s11 = scalar_select 0, %s10, %s8
  $region1: #{attend_approximator_forward.1} parent=0
    #allocation2 [shape = 'u8[1024]{0}', space=vmem, size = 0x400, scoped, tag = 'output window, operand 0, single buffered']
    #allocation3 [shape = 's32[1]{0}', space=sflag, size = 0x4, scoped, tag = 'scoped memory for attend_approximator_forward.1']
    %12 = vsyncpa [#allocation3], 0
    // Predicated region
    $region2: #{attend_approximator_forward.1} parent=1 // pred_check
      _
    $region3: #{attend_approximator_forward.1} parent=1 // pred_check_branch
      %14 = sbr.rel (0) target = $region5
    $region4: #{attend_approximator_forward.1} parent=1 // pred_region
      _
    $region5: #{attend_approximator_forward.1} parent=1 // pred_fallthru
      _
    // Predicated region
    $region6: #{attend_approximator_forward.1} parent=1 // pred_check
      _
    $region7: #{attend_approximator_forward.1} parent=1 // pred_check_branch
      %16 = sbr.rel (0) target = $region9
    $region8: #{attend_approximator_forward.1} parent=1 // pred_region
      _
    $region9: #{attend_approximator_forward.1} parent=1 // pred_fallthru
      _
    // Predicated region
    $region10: #{attend_approximator_forward.1} parent=1 // pred_check
      _
    $region11: #{attend_approximator_forward.1} parent=1 // pred_check_branch
      %18 = sbr.rel (0) target = $region13
    $region12: #{attend_approximator_forward.1} parent=1 // pred_region
      _
    $region13: #{attend_approximator_forward.1} parent=1 // pred_fallthru
      _
    // Predicated region
    $region14: #{attend_approximator_forward.1} parent=1 // pred_check
      _
    $region15: #{attend_approximator_forward.1} parent=1 // pred_check_branch
      %20 = sbr.rel (0) target = $region17
    $region16: #{attend_approximator_forward.1} parent=1 // pred_region
      _
    $region17: #{attend_approximator_forward.1} parent=1 // pred_fallthru
      _
    // Predicated region
    $region18: #{attend_approximator_forward.1} parent=1 // pred_check
      _
    $region19: #{attend_approximator_forward.1} parent=1 // pred_check_branch
      %22 = sbr.rel (0) target = $region21
    $region20: #{attend_approximator_forward.1} parent=1 // pred_region
      _
    $region21: #{attend_approximator_forward.1} parent=1 // pred_fallthru
      _
    // Predicated region
    $region22: #{attend_approximator_forward.1} parent=1 // pred_check
      _
    $region23: #{attend_approximator_forward.1} parent=1 // pred_check_branch
      %24 = sbr.rel (0) target = $region25
    $region24: #{attend_approximator_forward.1} parent=1 // pred_region
      _
    $region25: #{attend_approximator_forward.1} parent=1 // pred_fallthru
      _
    // Predicated region
    $region26: #{attend_approximator_forward.1} parent=1 // pred_check
      _
    $region27: #{attend_approximator_forward.1} parent=1 // pred_check_branch
      %26 = sbr.rel (0) target = $region29
    $region28: #{attend_approximator_forward.1} parent=1 // pred_region
      _
    $region29: #{attend_approximator_forward.1} parent=1 // pred_fallthru
      _
    %v28 = vld [vmem:[%s0] sm:$0xff]
    %v29 = vld [vmem:[%s0 + $0x8] sm:$0xff]
    %v30 = vld [vmem:[%s2] sm:$0xff]
    %v31 = vld [vmem:[%s2 + $0x8] sm:$0xff]
    %vm32 = vcmask 130048
    %v34 = vsel %vm32, %v28, 0
    %v37 = vsel %vm32, %v29, 0
    %39 = vmatprep.subr.mxu0 0.0
    %40 = vmatpush1.msra.mxu0 %v30
    %41 = vmatprep.subr.mxu0 0.0
    %42 = vmatpush1.msra.mxu0 %v31
    %43 = vmatprep.subr.mxu0 0.0
    %44 = vmatpush1.msra.mxu0 0.0
    %45 = vmatprep.subr.mxu0 0.0
    %46 = vmatpush1.msra.mxu0 0.0
    %47 = vmatprep.subr.mxu0 0.0
    %48 = vmatpush1.msra.mxu0 0.0
    %49 = vmatprep.subr.mxu0 0.0
    %50 = vmatpush1.msra.mxu0 0.0
    %51 = vmatprep.subr.mxu0 0.0
    %52 = vmatpush1.msra.mxu0 0.0
    %53 = vmatprep.subr.mxu0 0.0
    %54 = vmatpush1.msra.mxu0 0.0
    %55 = vmatprep.subr.mxu0 0.0
    %56 = vmatpush1.msra.mxu0 0.0
    %57 = vmatprep.subr.mxu0 0.0
    %58 = vmatpush1.msra.mxu0 0.0
    %59 = vmatprep.subr.mxu0 0.0
    %60 = vmatpush1.msra.mxu0 0.0
    %61 = vmatprep.subr.mxu0 0.0
    %62 = vmatpush1.msra.mxu0 0.0
    %63 = vmatprep.subr.mxu0 0.0
    %64 = vmatpush1.msra.mxu0 0.0
    %65 = vmatprep.subr.mxu0 0.0
    %66 = vmatpush1.msra.mxu0 0.0
    %67 = vmatprep.subr.mxu0 0.0
    %68 = vmatpush1.msra.mxu0 0.0
    %69 = vmatprep.subr.mxu0 0.0
    %70 = vmatpush1.msra.mxu0 0.0
    %71 = vmatprep.subr.mxu0 0.0
    %72 = vmatpush1.msra.mxu0 0.0
    %73 = vmatprep.subr.mxu0 0.0
    %74 = vmatpush1.msra.mxu0 0.0
    %75 = vmatprep.subr.mxu0 0.0
    %76 = vmatpush1.msra.mxu0 0.0
    %77 = vmatprep.subr.mxu0 0.0
    %78 = vmatpush1.msra.mxu0 0.0
    %79 = vmatprep.subr.mxu0 0.0
    %80 = vmatpush1.msra.mxu0 0.0
    %81 = vmatprep.subr.mxu0 0.0
    %82 = vmatpush1.msra.mxu0 0.0
    %83 = vmatprep.subr.mxu0 0.0
    %84 = vmatpush1.msra.mxu0 0.0
    %85 = vmatprep.subr.mxu0 0.0
    %86 = vmatpush1.msra.mxu0 0.0
    %87 = vmatprep.subr.mxu0 0.0
    %88 = vmatpush1.msra.mxu0 0.0
    %89 = vmatprep.subr.mxu0 0.0
    %90 = vmatpush1.msra.mxu0 0.0
    %91 = vmatprep.subr.mxu0 0.0
    %92 = vmatpush1.msra.mxu0 0.0
    %93 = vmatprep.subr.mxu0 0.0
    %94 = vmatpush1.msra.mxu0 0.0
    %95 = vmatprep.subr.mxu0 0.0
    %96 = vmatpush1.msra.mxu0 0.0
    %97 = vmatprep.subr.mxu0 0.0
    %98 = vmatpush1.msra.mxu0 0.0
    %99 = vmatprep.subr.mxu0 0.0
    %100 = vmatpush1.msra.mxu0 0.0
    %101 = vmatprep.subr.mxu0 0.0
    %102 = vmatpush1.msra.mxu0 0.0
    %103 = vmatprep.mubr.f32.mxu0 0.0
    %104 = vmatmul.mubr.f32.gmra.mrb[0].mxu0 %v34
    %v105 = vpop.f32.mrb[0].mxu0
    %v106 = vadd.f32 0.0, %v105
    %v107 = vpop.f32.mrb[0].mxu0
    %108 = vmatprep.mubr.f32.mxu0 0.0
    %109 = vmatmul.mubr.f32.gmra.mrb[0].mxu0 %v37
    %v110 = vpop.f32.mrb[0].mxu0
    %v111 = vadd.f32 0.0, %v110
    %v112 = vpop.f32.mrb[0].mxu0
    %113 = vdwg.mxu0
    %v114 = vlaneseq
    %v115 = vshrl.u32 %v114, 7
    %v116 = vsub.s32 7, %v115
    %v117 = vrot.slane %v106, %v116
    %v118 = vlaneseq
    %v119 = vshrl.u32 %v118, 7
    %v120 = vsub.s32 7, %v119
    %v121 = vrot.slane %v111, %v120
    %124 = vrot.lane.b32.xlu0 %v106, 16
    %v125 = vpop.permute.xlu0 %124
    %126 = vrot.lane.b32.xlu0 %v111, 16
    %v127 = vpop.permute.xlu0 %126
    %v130 = vmul.f32 %v117, %v125
    %v131 = vmul.f32 %v121, %v127
    %134 = vrot.lane.b32.xlu0 %v130, 112
    %v135 = vpop.permute.xlu0 %134
    %136 = vrot.lane.b32.xlu0 %v131, 112
    %v137 = vpop.permute.xlu0 %136
    %vm140 = vcmask 64512
    %v141 = vsel %vm140, %v135, 0.0
    %142 = vadd.xlane.f32.xlu0 %v141
    %v143 = vpop.xlane.xlu0 %142
    %v144 = vsel %vm140, %v137, 0.0
    %145 = vadd.xlane.f32.xlu0 %v144
    %v146 = vpop.xlane.xlu0 %145
    %v149 = vlaneseq
    %v150 = vand.u32 %v149, 127
    %v151 = vlaneseq
    %v152 = vshrl.u32 %v151, 7
    %v153 = vsub.s32 %v150, %v152
    %v154 = vrot.slane %v143, %v153
    %v155 = vlaneseq
    %v156 = vshrl.u32 %v155, 7
    %v157 = vsub.s32 %v150, %v156
    %v158 = vrot.slane %v146, %v157
    %vm159 = vcmask 1041409
    %v160 = vsel %vm159, %v158, %v154
    %vm162 = vcmask 58368
    %v163 = vsel %vm162, %v160, -inf
    %164 = vmax.xlane.f32.xlu0 %v163
    %v165 = vpop.xlane.xlu0 %164
    %v167 = vlaneseq
    %v168 = vshrl.u32 %v167, 7
    %v169 = vsub.s32 0, %v168
    %v170 = vrot.slane %v165, %v169
    %v171 = vlaneseq
    %v172 = vshrl.u32 %v171, 7
    %v173 = vsub.s32 1, %v172
    %v174 = vrot.slane %v165, %v173
    %v177 = vsub.f32 %v143, %v170
    %v178 = vsub.f32 %v146, %v174
    %v179 = vmul.f32 %v177, 1.442695
    %v180 = vpow.pop %v179
    %v181 = vmul.f32 %v178, 1.442695
    %v182 = vpow.pop %v181
    %185 = vset.pattern.permute.xlu0 0
    %186 = vperm.xlu0 %185, %v180
    %v187 = vpop.permute.xlu0 %186
    %188 = vset.pattern.permute.xlu0 0
    %189 = vperm.xlu0 %188, %v182
    %v190 = vpop.permute.xlu0 %189
    %v191 = vlaneseq
    %v192 = vshrl.u32 %v191, 7
    %v193 = vsub.s32 %v150, %v192
    %v194 = vrot.slane %v187, %v193
    %v195 = vlaneseq
    %v196 = vshrl.u32 %v195, 7
    %v197 = vsub.s32 %v150, %v196
    %v198 = vrot.slane %v190, %v197
    %v199 = vsel %vm159, %v198, %v194
    %v201 = vsel %vm162, %v199, 0.0
    %202 = vadd.xlane.f32.xlu0 %v201
    %v203 = vpop.xlane.xlu0 %202
    %v204 = vrcp.pop %v203
    %v206 = vlaneseq
    %v207 = vshrl.u32 %v206, 7
    %v208 = vsub.s32 0, %v207
    %v209 = vrot.slane %v204, %v208
    %v210 = vlaneseq
    %v211 = vshrl.u32 %v210, 7
    %v212 = vsub.s32 1, %v211
    %v213 = vrot.slane %v204, %v212
    %v216 = vmul.f32 %v180, %v209
    %v217 = vmul.f32 %v182, %v213
    %219 = vset.pattern.permute.xlu0 0
    %220 = vperm.xlu0 %219, %v216
    %v221 = vpop.permute.xlu0 %220
    %224 = vset.pattern.permute.xlu0 0
    %225 = vperm.xlu0 %224, %v217
    %v226 = vpop.permute.xlu0 %225
    %v228 = vmul.f32 %v221, %v106
    %v229 = vmul.f32 %v226, %v111
    %vm230 = vcmask 130112
    %v231 = vsel %vm230, %v228, 0.0
    %v232 = vrot.slane %v231, 4
    %v233 = vadd.f32 %v231, %v232
    %v234 = vrot.slane %v233, 2
    %v235 = vadd.f32 %v233, %v234
    %v236 = vrot.slane %v235, 1
    %v237 = vadd.f32 %v235, %v236
    %v238 = vsel %vm230, %v229, 0.0
    %v239 = vrot.slane %v238, 4
    %v240 = vadd.f32 %v238, %v239
    %v241 = vrot.slane %v240, 2
    %v242 = vadd.f32 %v240, %v241
    %v243 = vrot.slane %v242, 1
    %v244 = vadd.f32 %v242, %v243
    %v245 = vld [vmem:[%s2 + $0x10] sm:$0xff]
    %v248 = vsel %vm159, %v244, %v237
    %249 = vrot.lane.b32.xlu0 %v248, 120
    %v250 = vpop.permute.xlu0 %249
    %v251 = vsel %vm140, %v250, 0
    %253 = vmatprep.subr.mxu0 0.0
    %254 = vmatpush1.msra.mxu0 %v245
    %255 = vmatprep.subr.mxu0 0.0
    %256 = vmatpush1.msra.mxu0 0.0
    %257 = vmatprep.subr.mxu0 0.0
    %258 = vmatpush1.msra.mxu0 0.0
    %259 = vmatprep.subr.mxu0 0.0
    %260 = vmatpush1.msra.mxu0 0.0
    %261 = vmatprep.subr.mxu0 0.0
    %262 = vmatpush1.msra.mxu0 0.0
    %263 = vmatprep.subr.mxu0 0.0
    %264 = vmatpush1.msra.mxu0 0.0
    %265 = vmatprep.subr.mxu0 0.0
    %266 = vmatpush1.msra.mxu0 0.0
    %267 = vmatprep.subr.mxu0 0.0
    %268 = vmatpush1.msra.mxu0 0.0
    %269 = vmatprep.subr.mxu0 0.0
    %270 = vmatpush1.msra.mxu0 0.0
    %271 = vmatprep.subr.mxu0 0.0
    %272 = vmatpush1.msra.mxu0 0.0
    %273 = vmatprep.subr.mxu0 0.0
    %274 = vmatpush1.msra.mxu0 0.0
    %275 = vmatprep.subr.mxu0 0.0
    %276 = vmatpush1.msra.mxu0 0.0
    %277 = vmatprep.subr.mxu0 0.0
    %278 = vmatpush1.msra.mxu0 0.0
    %279 = vmatprep.subr.mxu0 0.0
    %280 = vmatpush1.msra.mxu0 0.0
    %281 = vmatprep.subr.mxu0 0.0
    %282 = vmatpush1.msra.mxu0 0.0
    %283 = vmatprep.subr.mxu0 0.0
    %284 = vmatpush1.msra.mxu0 0.0
    %285 = vmatprep.subr.mxu0 0.0
    %286 = vmatpush1.msra.mxu0 0.0
    %287 = vmatprep.subr.mxu0 0.0
    %288 = vmatpush1.msra.mxu0 0.0
    %289 = vmatprep.subr.mxu0 0.0
    %290 = vmatpush1.msra.mxu0 0.0
    %291 = vmatprep.subr.mxu0 0.0
    %292 = vmatpush1.msra.mxu0 0.0
    %293 = vmatprep.subr.mxu0 0.0
    %294 = vmatpush1.msra.mxu0 0.0
    %295 = vmatprep.subr.mxu0 0.0
    %296 = vmatpush1.msra.mxu0 0.0
    %297 = vmatprep.subr.mxu0 0.0
    %298 = vmatpush1.msra.mxu0 0.0
    %299 = vmatprep.subr.mxu0 0.0
    %300 = vmatpush1.msra.mxu0 0.0
    %301 = vmatprep.subr.mxu0 0.0
    %302 = vmatpush1.msra.mxu0 0.0
    %303 = vmatprep.subr.mxu0 0.0
    %304 = vmatpush1.msra.mxu0 0.0
    %305 = vmatprep.subr.mxu0 0.0
    %306 = vmatpush1.msra.mxu0 0.0
    %307 = vmatprep.subr.mxu0 0.0
    %308 = vmatpush1.msra.mxu0 0.0
    %309 = vmatprep.subr.mxu0 0.0
    %310 = vmatpush1.msra.mxu0 0.0
    %311 = vmatprep.subr.mxu0 0.0
    %312 = vmatpush1.msra.mxu0 0.0
    %313 = vmatprep.subr.mxu0 0.0
    %314 = vmatpush1.msra.mxu0 0.0
    %315 = vmatprep.subr.mxu0 0.0
    %316 = vmatpush1.msra.mxu0 0.0
    %317 = vmatprep.mubr.f32.mxu0 0.0
    %318 = vmatmul.mubr.f32.gmra.mrb[0].mxu0 %v251
    %v319 = vpop.f32.mrb[0].mxu0
    %v320 = vadd.f32 0.0, %v319
    %v321 = vpop.f32.mrb[0].mxu0
    %322 = vdwg.mxu0
    %s323 = scalar_lea.vmem %s0, 7
    %v324 = vld [vmem:[%s323] ss:$8 sm:$0x3]
    %v325 = vadd.f32 %v324, %v320
    %v326 = vld [vmem:[%s6] sm:$0x1]
    %v327 = vld [vmem:[%s6 + $0x1] sm:$0x1]
    %vm328 = vcmask 123904
    %v329 = vsel %vm328, %v325, 0.0
    %330 = vadd.xlane.f32.xlu0 %v329
    %v331 = vpop.xlane.xlu0 %330
    %v332 = vrcp.pop 16.0
    %v333 = vmul.f32 %v331, %v332
    %v334 = vsub.f32 %v325, %v333
    %v335 = vmul.f32 %v334, %v334
    %v336 = vsel %vm328, %v335, 0.0
    %337 = vadd.xlane.f32.xlu0 %v336
    %v338 = vpop.xlane.xlu0 %337
    %v339 = vmul.f32 %v338, %v332
    %v340 = vadd.f32 %v339, 1e-05
    %v341 = vrsqrt.pop %v340
    %v342 = vmul.f32 %v334, %v341
    %v343 = vlaneseq
    %v344 = vshrl.u32 %v343, 7
    %v345 = vsub.s32 0, %v344
    %v346 = vrot.slane %v326, %v345
    %v347 = vmul.f32 %v342, %v346
    %v348 = vlaneseq
    %v349 = vshrl.u32 %v348, 7
    %v350 = vsub.s32 0, %v349
    %v351 = vrot.slane %v327, %v350
    %v352 = vadd.f32 %v347, %v351
    %v353 = vld [vmem:[%s2 + $0x18] sm:$0xff]
    %v354 = vld [vmem:[%s2 + $0x20] sm:$0xff]
    %v355 = vld [vmem:[%s6 + $0x2] sm:$0x1]
    %v356 = vlaneseq
    %v357 = vshrl.u32 %v356, 7
    %v358 = vsub.s32 0, %v357
    %v359 = vrot.slane %v355, %v358
    %v361 = vsel %vm32, %v352, 0
    %363 = vmatprep.subr.mxu0 0.0
    %364 = vmatpush1.msra.mxu0 %v353
    %365 = vmatprep.subr.mxu0 0.0
    %366 = vmatpush1.msra.mxu0 %v354
    %367 = vmatprep.subr.mxu0 0.0
    %368 = vmatpush1.msra.mxu0 0.0
    %369 = vmatprep.subr.mxu0 0.0
    %370 = vmatpush1.msra.mxu0 0.0
    %371 = vmatprep.subr.mxu0 0.0
    %372 = vmatpush1.msra.mxu0 0.0
    %373 = vmatprep.subr.mxu0 0.0
    %374 = vmatpush1.msra.mxu0 0.0
    %375 = vmatprep.subr.mxu0 0.0
    %376 = vmatpush1.msra.mxu0 0.0
    %377 = vmatprep.subr.mxu0 0.0
    %378 = vmatpush1.msra.mxu0 0.0
    %379 = vmatprep.subr.mxu0 0.0
    %380 = vmatpush1.msra.mxu0 0.0
    %381 = vmatprep.subr.mxu0 0.0
    %382 = vmatpush1.msra.mxu0 0.0
    %383 = vmatprep.subr.mxu0 0.0
    %384 = vmatpush1.msra.mxu0 0.0
    %385 = vmatprep.subr.mxu0 0.0
    %386 = vmatpush1.msra.mxu0 0.0
    %387 = vmatprep.subr.mxu0 0.0
    %388 = vmatpush1.msra.mxu0 0.0
    %389 = vmatprep.subr.mxu0 0.0
    %390 = vmatpush1.msra.mxu0 0.0
    %391 = vmatprep.subr.mxu0 0.0
    %392 = vmatpush1.msra.mxu0 0.0
    %393 = vmatprep.subr.mxu0 0.0
    %394 = vmatpush1.msra.mxu0 0.0
    %395 = vmatprep.subr.mxu0 0.0
    %396 = vmatpush1.msra.mxu0 0.0
    %397 = vmatprep.subr.mxu0 0.0
    %398 = vmatpush1.msra.mxu0 0.0
    %399 = vmatprep.subr.mxu0 0.0
    %400 = vmatpush1.msra.mxu0 0.0
    %401 = vmatprep.subr.mxu0 0.0
    %402 = vmatpush1.msra.mxu0 0.0
    %403 = vmatprep.subr.mxu0 0.0
    %404 = vmatpush1.msra.mxu0 0.0
    %405 = vmatprep.subr.mxu0 0.0
    %406 = vmatpush1.msra.mxu0 0.0
    %407 = vmatprep.subr.mxu0 0.0
    %408 = vmatpush1.msra.mxu0 0.0
    %409 = vmatprep.subr.mxu0 0.0
    %410 = vmatpush1.msra.mxu0 0.0
    %411 = vmatprep.subr.mxu0 0.0
    %412 = vmatpush1.msra.mxu0 0.0
    %413 = vmatprep.subr.mxu0 0.0
    %414 = vmatpush1.msra.mxu0 0.0
    %415 = vmatprep.subr.mxu0 0.0
    %416 = vmatpush1.msra.mxu0 0.0
    %417 = vmatprep.subr.mxu0 0.0
    %418 = vmatpush1.msra.mxu0 0.0
    %419 = vmatprep.subr.mxu0 0.0
    %420 = vmatpush1.msra.mxu0 0.0
    %421 = vmatprep.subr.mxu0 0.0
    %422 = vmatpush1.msra.mxu0 0.0
    %423 = vmatprep.subr.mxu0 0.0
    %424 = vmatpush1.msra.mxu0 0.0
    %425 = vmatprep.subr.mxu0 0.0
    %426 = vmatpush1.msra.mxu0 0.0
    %427 = vmatprep.mubr.f32.mxu0 0.0
    %428 = vmatmul.mubr.f32.gmra.mrb[0].mxu0 %v361
    %v429 = vpop.f32.mrb[0].mxu0
    %v430 = vadd.f32 %v359, %v429
    %v431 = vpop.f32.mrb[0].mxu0
    %432 = vdwg.mxu0
    %v433 = vmax.f32 %v430, 0.0
    %v434 = vld [vmem:[%s2 + $0x28] sm:$0xff]
    %v435 = vld [vmem:[%s2 + $0x30] sm:$0xff]
    %v436 = vld [vmem:[%s2 + $0x38] sm:$0xff]
    %v437 = vld [vmem:[%s2 + $0x40] sm:$0xff]
    %v438 = vld [vmem:[%s2 + $0x48] sm:$0xff]
    %v439 = vld [vmem:[%s2 + $0x50] sm:$0xff]
    %v440 = vld [vmem:[%s2 + $0x58] sm:$0xff]
    %v441 = vld [vmem:[%s2 + $0x60] sm:$0xff]
    %v442 = vld [vmem:[%s6 + $0x3] sm:$0x1]
    %v443 = vlaneseq
    %v444 = vshrl.u32 %v443, 7
    %v445 = vsub.s32 0, %v444
    %v446 = vrot.slane %v442, %v445
    %vm447 = vcmask 523264
    %v449 = vsel %vm447, %v433, 0
    %451 = vmatprep.subr.mxu0 0.0
    %452 = vmatpush1.msra.mxu0 %v434
    %453 = vmatprep.subr.mxu0 0.0
    %454 = vmatpush1.msra.mxu0 %v435
    %455 = vmatprep.subr.mxu0 0.0
    %456 = vmatpush1.msra.mxu0 %v436
    %457 = vmatprep.subr.mxu0 0.0
    %458 = vmatpush1.msra.mxu0 %v437
    %459 = vmatprep.subr.mxu0 0.0
    %460 = vmatpush1.msra.mxu0 %v438
    %461 = vmatprep.subr.mxu0 0.0
    %462 = vmatpush1.msra.mxu0 %v439
    %463 = vmatprep.subr.mxu0 0.0
    %464 = vmatpush1.msra.mxu0 %v440
    %465 = vmatprep.subr.mxu0 0.0
    %466 = vmatpush1.msra.mxu0 %v441
    %467 = vmatprep.subr.mxu0 0.0
    %468 = vmatpush1.msra.mxu0 0.0
    %469 = vmatprep.subr.mxu0 0.0
    %470 = vmatpush1.msra.mxu0 0.0
    %471 = vmatprep.subr.mxu0 0.0
    %472 = vmatpush1.msra.mxu0 0.0
    %473 = vmatprep.subr.mxu0 0.0
    %474 = vmatpush1.msra.mxu0 0.0
    %475 = vmatprep.subr.mxu0 0.0
    %476 = vmatpush1.msra.mxu0 0.0
    %477 = vmatprep.subr.mxu0 0.0
    %478 = vmatpush1.msra.mxu0 0.0
    %479 = vmatprep.subr.mxu0 0.0
    %480 = vmatpush1.msra.mxu0 0.0
    %481 = vmatprep.subr.mxu0 0.0
    %482 = vmatpush1.msra.mxu0 0.0
    %483 = vmatprep.subr.mxu0 0.0
    %484 = vmatpush1.msra.mxu0 0.0
    %485 = vmatprep.subr.mxu0 0.0
    %486 = vmatpush1.msra.mxu0 0.0
    %487 = vmatprep.subr.mxu0 0.0
    %488 = vmatpush1.msra.mxu0 0.0
    %489 = vmatprep.subr.mxu0 0.0
    %490 = vmatpush1.msra.mxu0 0.0
    %491 = vmatprep.subr.mxu0 0.0
    %492 = vmatpush1.msra.mxu0 0.0
    %493 = vmatprep.subr.mxu0 0.0
    %494 = vmatpush1.msra.mxu0 0.0
    %495 = vmatprep.subr.mxu0 0.0
    %496 = vmatpush1.msra.mxu0 0.0
    %497 = vmatprep.subr.mxu0 0.0
    %498 = vmatpush1.msra.mxu0 0.0
    %499 = vmatprep.subr.mxu0 0.0
    %500 = vmatpush1.msra.mxu0 0.0
    %501 = vmatprep.subr.mxu0 0.0
    %502 = vmatpush1.msra.mxu0 0.0
    %503 = vmatprep.subr.mxu0 0.0
    %504 = vmatpush1.msra.mxu0 0.0
    %505 = vmatprep.subr.mxu0 0.0
    %506 = vmatpush1.msra.mxu0 0.0
    %507 = vmatprep.subr.mxu0 0.0
    %508 = vmatpush1.msra.mxu0 0.0
    %509 = vmatprep.subr.mxu0 0.0
    %510 = vmatpush1.msra.mxu0 0.0
    %511 = vmatprep.subr.mxu0 0.0
    %512 = vmatpush1.msra.mxu0 0.0
    %513 = vmatprep.subr.mxu0 0.0
    %514 = vmatpush1.msra.mxu0 0.0
    %515 = vmatprep.mubr.f32.mxu0 0.0
    %516 = vmatmul.mubr.f32.gmra.mrb[0].mxu0 %v449
    %v517 = vpop.f32.mrb[0].mxu0
    %v518 = vadd.f32 %v446, %v517
    %v519 = vpop.f32.mrb[0].mxu0
    %520 = vdwg.mxu0
    %v521 = vadd.f32 %v518, %v352
    %v522 = vld [vmem:[%s6 + $0x4] sm:$0x1]
    %v523 = vld [vmem:[%s6 + $0x5] sm:$0x1]
    %v524 = vsel %vm328, %v521, 0.0
    %525 = vadd.xlane.f32.xlu0 %v524
    %v526 = vpop.xlane.xlu0 %525
    %v527 = vmul.f32 %v526, %v332
    %v528 = vsub.f32 %v521, %v527
    %v529 = vmul.f32 %v528, %v528
    %v530 = vsel %vm328, %v529, 0.0
    %531 = vadd.xlane.f32.xlu0 %v530
    %v532 = vpop.xlane.xlu0 %531
    %v533 = vmul.f32 %v532, %v332
    %v534 = vadd.f32 %v533, 1e-05
    %v535 = vrsqrt.pop %v534
    %v536 = vmul.f32 %v528, %v535
    %v537 = vlaneseq
    %v538 = vshrl.u32 %v537, 7
    %v539 = vsub.s32 0, %v538
    %v540 = vrot.slane %v522, %v539
    %v541 = vmul.f32 %v536, %v540
    %v542 = vlaneseq
    %v543 = vshrl.u32 %v542, 7
    %v544 = vsub.s32 0, %v543
    %v545 = vrot.slane %v523, %v544
    %v546 = vadd.f32 %v541, %v545
    %v547 = vld [vmem:[%s1] sm:$0x3]
    %v548 = vld [vmem:[%s3] sm:$0xf]
    %v549 = vld [vmem:[%s3 + $0x4] sm:$0xf]
    %v550 = vld [vmem:[%s3 + $0x8] sm:$0xf]
    %v551 = vld [vmem:[%s3 + $0xc] sm:$0xf]
    %v552 = vld [vmem:[%s3 + $0x10] sm:$0xf]
    %v553 = vld [vmem:[%s3 + $0x14] sm:$0xf]
    %v554 = vld [vmem:[%s3 + $0x18] sm:$0xf]
    %v555 = vld [vmem:[%s3 + $0x1c] sm:$0xf]
    %v556 = vld [vmem:[%s3 + $0x20] sm:$0xf]
    %v557 = vld [vmem:[%s3 + $0x24] sm:$0xf]
    %v558 = vld [vmem:[%s3 + $0x28] sm:$0xf]
    %v559 = vld [vmem:[%s3 + $0x2c] sm:$0xf]
    %v560 = vld [vmem:[%s3 + $0x30] sm:$0xf]
    %v561 = vld [vmem:[%s3 + $0x34] sm:$0xf]
    %v562 = vld [vmem:[%s3 + $0x38] sm:$0xf]
    %v563 = vld [vmem:[%s3 + $0x3c] sm:$0xf]
    %v564 = vld [vmem:[%s3 + $0x40] sm:$0xf]
    %v565 = vld [vmem:[%s3 + $0x44] sm:$0xf]
    %v566 = vld [vmem:[%s3 + $0x48] sm:$0xf]
    %v567 = vld [vmem:[%s3 + $0x4c] sm:$0xf]
    %v568 = vld [vmem:[%s3 + $0x50] sm:$0xf]
    %v569 = vld [vmem:[%s3 + $0x54] sm:$0xf]
    %v570 = vld [vmem:[%s3 + $0x58] sm:$0xf]
    %v571 = vld [vmem:[%s3 + $0x5c] sm:$0xf]
    %v572 = vld [vmem:[%s3 + $0x60] sm:$0xf]
    %v573 = vld [vmem:[%s3 + $0x64] sm:$0xf]
    %v574 = vld [vmem:[%s3 + $0x68] sm:$0xf]
    %v575 = vld [vmem:[%s3 + $0x6c] sm:$0xf]
    %v576 = vld [vmem:[%s3 + $0x70] sm:$0xf]
    %v577 = vld [vmem:[%s3 + $0x74] sm:$0xf]
    %v578 = vld [vmem:[%s3 + $0x78] sm:$0xf]
    %v579 = vld [vmem:[%s3 + $0x7c] sm:$0xf]
    %v580 = vld [vmem:[%s2 + $0x68] sm:$0xff]
    %v581 = vld [vmem:[%s2 + $0x70] sm:$0xff]
    %v583 = vsel %vm32, %v546, 0
    %585 = vmatprep.subr.mxu0 0.0
    %586 = vmatpush1.msra.mxu0 %v580
    %587 = vmatprep.subr.mxu0 0.0
    %588 = vmatpush1.msra.mxu0 %v581
    %589 = vmatprep.subr.mxu0 0.0
    %590 = vmatpush1.msra.mxu0 0.0
    %591 = vmatprep.subr.mxu0 0.0
    %592 = vmatpush1.msra.mxu0 0.0
    %593 = vmatprep.subr.mxu0 0.0
    %594 = vmatpush1.msra.mxu0 0.0
    %595 = vmatprep.subr.mxu0 0.0
    %596 = vmatpush1.msra.mxu0 0.0
    %597 = vmatprep.subr.mxu0 0.0
    %598 = vmatpush1.msra.mxu0 0.0
    %599 = vmatprep.subr.mxu0 0.0
    %600 = vmatpush1.msra.mxu0 0.0
    %601 = vmatprep.subr.mxu0 0.0
    %602 = vmatpush1.msra.mxu0 0.0
    %603 = vmatprep.subr.mxu0 0.0
    %604 = vmatpush1.msra.mxu0 0.0
    %605 = vmatprep.subr.mxu0 0.0
    %606 = vmatpush1.msra.mxu0 0.0
    %607 = vmatprep.subr.mxu0 0.0
    %608 = vmatpush1.msra.mxu0 0.0
    %609 = vmatprep.subr.mxu0 0.0
    %610 = vmatpush1.msra.mxu0 0.0
    %611 = vmatprep.subr.mxu0 0.0
    %612 = vmatpush1.msra.mxu0 0.0
    %613 = vmatprep.subr.mxu0 0.0
    %614 = vmatpush1.msra.mxu0 0.0
    %615 = vmatprep.subr.mxu0 0.0
    %616 = vmatpush1.msra.mxu0 0.0
    %617 = vmatprep.subr.mxu0 0.0
    %618 = vmatpush1.msra.mxu0 0.0
    %619 = vmatprep.subr.mxu0 0.0
    %620 = vmatpush1.msra.mxu0 0.0
    %621 = vmatprep.subr.mxu0 0.0
    %622 = vmatpush1.msra.mxu0 0.0
    %623 = vmatprep.subr.mxu0 0.0
    %624 = vmatpush1.msra.mxu0 0.0
    %625 = vmatprep.subr.mxu0 0.0
    %626 = vmatpush1.msra.mxu0 0.0
    %627 = vmatprep.subr.mxu0 0.0
    %628 = vmatpush1.msra.mxu0 0.0
    %629 = vmatprep.subr.mxu0 0.0
    %630 = vmatpush1.msra.mxu0 0.0
    %631 = vmatprep.subr.mxu0 0.0
    %632 = vmatpush1.msra.mxu0 0.0
    %633 = vmatprep.subr.mxu0 0.0
    %634 = vmatpush1.msra.mxu0 0.0
    %635 = vmatprep.subr.mxu0 0.0
    %636 = vmatpush1.msra.mxu0 0.0
    %637 = vmatprep.subr.mxu0 0.0
    %638 = vmatpush1.msra.mxu0 0.0
    %639 = vmatprep.subr.mxu0 0.0
    %640 = vmatpush1.msra.mxu0 0.0
    %641 = vmatprep.subr.mxu0 0.0
    %642 = vmatpush1.msra.mxu0 0.0
    %643 = vmatprep.subr.mxu0 0.0
    %644 = vmatpush1.msra.mxu0 0.0
    %645 = vmatprep.subr.mxu0 0.0
    %646 = vmatpush1.msra.mxu0 0.0
    %647 = vmatprep.subr.mxu0 0.0
    %648 = vmatpush1.msra.mxu0 0.0
    %649 = vmatprep.mubr.f32.mxu0 0.0
    %650 = vmatmul.mubr.f32.gmra.mrb[0].mxu0 %v583
    %v651 = vpop.f32.mrb[0].mxu0
    %v652 = vadd.f32 0.0, %v651
    %v653 = vpop.f32.mrb[0].mxu0
    %654 = vdwg.mxu0
    %v657 = vunpack.c.l.s4 1966171168
    %v658 = vunpack.c.0.s8 %v657
    %v659 = vlaneseq
    %v660 = vshrl.u32 %v659, 7
    %v661 = vsub.s32 %v658, %v660
    %v662 = vrot.slane %v547, %v661
    %v663 = vcombine.high %v662, %v662
    %v665 = vunpack.c.l.s4 1966171168
    %v666 = vunpack.c.0.s8 %v665
    %v667 = vlaneseq
    %v668 = vshrl.u32 %v667, 7
    %v669 = vsub.s32 %v666, %v668
    %v670 = vrot.slane %v662, %v669
    %v672 = vunpack.c.l.s4 1966171168
    %v673 = vunpack.c.0.s8 %v672
    %v674 = vlaneseq
    %v675 = vshrl.u32 %v674, 7
    %v676 = vsub.s32 %v673, %v675
    %v677 = vrot.slane %v663, %v676
    %v712 = vunpack.c.l.b16 %v548
    %v713 = vunpack.c.l.b16 %v549
    %v714 = vunpack.c.l.b16 %v550
    %v715 = vunpack.c.l.b16 %v551
    %v716 = vunpack.c.l.b16 %v552
    %v717 = vunpack.c.l.b16 %v553
    %v718 = vunpack.c.l.b16 %v554
    %v719 = vunpack.c.l.b16 %v555
    %v720 = vunpack.c.l.b16 %v556
    %v721 = vunpack.c.l.b16 %v557
    %v722 = vunpack.c.l.b16 %v558
    %v723 = vunpack.c.l.b16 %v559
    %v724 = vunpack.c.l.b16 %v560
    %v725 = vunpack.c.l.b16 %v561
    %v726 = vunpack.c.l.b16 %v562
    %v727 = vunpack.c.l.b16 %v563
    %v728 = vunpack.c.l.b16 %v564
    %v729 = vunpack.c.l.b16 %v565
    %v730 = vunpack.c.l.b16 %v566
    %v731 = vunpack.c.l.b16 %v567
    %v732 = vunpack.c.l.b16 %v568
    %v733 = vunpack.c.l.b16 %v569
    %v734 = vunpack.c.l.b16 %v570
    %v735 = vunpack.c.l.b16 %v571
    %v736 = vunpack.c.l.b16 %v572
    %v737 = vunpack.c.l.b16 %v573
    %v738 = vunpack.c.l.b16 %v574
    %v739 = vunpack.c.l.b16 %v575
    %v740 = vunpack.c.l.b16 %v576
    %v741 = vunpack.c.l.b16 %v577
    %v742 = vunpack.c.l.b16 %v578
    %v743 = vunpack.c.l.b16 %v579
    %v744 = vpack.c.b16 %v713, %v712
    %v745 = vpack.c.b16 %v715, %v714
    %v746 = vpack.c.b16 %v717, %v716
    %v747 = vpack.c.b16 %v719, %v718
    %v748 = vpack.c.b16 %v721, %v720
    %v749 = vpack.c.b16 %v723, %v722
    %v750 = vpack.c.b16 %v725, %v724
    %v751 = vpack.c.b16 %v727, %v726
    %v752 = vpack.c.b16 %v729, %v728
    %v753 = vpack.c.b16 %v731, %v730
    %v754 = vpack.c.b16 %v733, %v732
    %v755 = vpack.c.b16 %v735, %v734
    %v756 = vpack.c.b16 %v737, %v736
    %v757 = vpack.c.b16 %v739, %v738
    %v758 = vpack.c.b16 %v741, %v740
    %v759 = vpack.c.b16 %v743, %v742
    %776 = vmatprep.subr.bf16.mxu0 0
    %777 = vmatpush1.bf16.msra.mxu0 %v744
    %778 = vmatprep.subr.bf16.mxu0 0
    %779 = vmatpush1.bf16.msra.mxu0 %v745
    %780 = vmatprep.subr.bf16.mxu0 0
    %781 = vmatpush1.bf16.msra.mxu0 %v746
    %782 = vmatprep.subr.bf16.mxu0 0
    %783 = vmatpush1.bf16.msra.mxu0 %v747
    %784 = vmatprep.subr.bf16.mxu0 0
    %785 = vmatpush1.bf16.msra.mxu0 %v748
    %786 = vmatprep.subr.bf16.mxu0 0
    %787 = vmatpush1.bf16.msra.mxu0 %v749
    %788 = vmatprep.subr.bf16.mxu0 0
    %789 = vmatpush1.bf16.msra.mxu0 %v750
    %790 = vmatprep.subr.bf16.mxu0 0
    %791 = vmatpush1.bf16.msra.mxu0 %v751
    %792 = vmatprep.subr.bf16.mxu0 0
    %793 = vmatpush1.bf16.msra.mxu0 %v752
    %794 = vmatprep.subr.bf16.mxu0 0
    %795 = vmatpush1.bf16.msra.mxu0 %v753
    %796 = vmatprep.subr.bf16.mxu0 0
    %797 = vmatpush1.bf16.msra.mxu0 %v754
    %798 = vmatprep.subr.bf16.mxu0 0
    %799 = vmatpush1.bf16.msra.mxu0 %v755
    %800 = vmatprep.subr.bf16.mxu0 0
    %801 = vmatpush1.bf16.msra.mxu0 %v756
    %802 = vmatprep.subr.bf16.mxu0 0
    %803 = vmatpush1.bf16.msra.mxu0 %v757
    %804 = vmatprep.subr.bf16.mxu0 0
    %805 = vmatpush1.bf16.msra.mxu0 %v758
    %806 = vmatprep.subr.bf16.mxu0 0
    %807 = vmatpush1.bf16.msra.mxu0 %v759
    %808 = vmatprep.mubr.bf16.mxu0 %v677
    %809 = vmatmul.mubr.bf16.gmra.mrb[0].mxu0 %v670
    %v810 = vpop.f32.mrb[0].mxu0
    %v811 = vadd.f32 %v652, %v810
    %v812 = vpop.f32.mrb[0].mxu0
    %v813 = vpop.f32.mrb[0].mxu0
    %v814 = vpop.f32.mrb[0].mxu0
    %815 = vdwg.mxu0
    %v816 = vld [vmem:[%s6 + $0x6] sm:$0x1]
    %v817 = vlaneseq
    %v818 = vshrl.u32 %v817, 7
    %v819 = vsub.s32 0, %v818
    %v820 = vrot.slane %v816, %v819
    %v821 = vadd.f32 %v811, %v820
    %v822 = vmax.f32 %v821, 0.0
    %v823 = vpack.c.bf16 %v822, %v822
    %v824 = vld [vmem:[%s4] sm:$0xf]
    %v825 = vld [vmem:[%s4 + $0x4] sm:$0xf]
    %v826 = vld [vmem:[%s4 + $0x8] sm:$0xf]
    %v827 = vld [vmem:[%s4 + $0xc] sm:$0xf]
    %v828 = vld [vmem:[%s4 + $0x10] sm:$0xf]
    %v829 = vld [vmem:[%s4 + $0x14] sm:$0xf]
    %v830 = vld [vmem:[%s4 + $0x18] sm:$0xf]
    %v831 = vld [vmem:[%s4 + $0x1c] sm:$0xf]
    %v832 = vld [vmem:[%s6 + $0x7] sm:$0x1]
    %v833 = vlaneseq
    %v834 = vshrl.u32 %v833, 7
    %v835 = vsub.s32 0, %v834
    %v836 = vrot.slane %v832, %v835
    %v845 = vunpack.c.l.b16 %v824
    %v846 = vunpack.c.l.b16 %v825
    %v847 = vunpack.c.l.b16 %v826
    %v848 = vunpack.c.l.b16 %v827
    %v849 = vunpack.c.l.b16 %v828
    %v850 = vunpack.c.l.b16 %v829
    %v851 = vunpack.c.l.b16 %v830
    %v852 = vunpack.c.l.b16 %v831
    %v853 = vpack.c.b16 %v846, %v845
    %v854 = vpack.c.b16 %v848, %v847
    %v855 = vpack.c.b16 %v850, %v849
    %v856 = vpack.c.b16 %v852, %v851
    %v862 = vsel %vm447, %v823, 0
    %864 = vmatprep.subr.bf16.mxu0 0
    %865 = vmatpush1.bf16.msra.mxu0 %v853
    %866 = vmatprep.subr.bf16.mxu0 0
    %867 = vmatpush1.bf16.msra.mxu0 %v854
    %868 = vmatprep.subr.bf16.mxu0 0
    %869 = vmatpush1.bf16.msra.mxu0 %v855
    %870 = vmatprep.subr.bf16.mxu0 0
    %871 = vmatpush1.bf16.msra.mxu0 %v856
    %872 = vmatprep.subr.bf16.mxu0 0
    %873 = vmatpush1.bf16.msra.mxu0 0
    %874 = vmatprep.subr.bf16.mxu0 0
    %875 = vmatpush1.bf16.msra.mxu0 0
    %876 = vmatprep.subr.bf16.mxu0 0
    %877 = vmatpush1.bf16.msra.mxu0 0
    %878 = vmatprep.subr.bf16.mxu0 0
    %879 = vmatpush1.bf16.msra.mxu0 0
    %880 = vmatprep.subr.bf16.mxu0 0
    %881 = vmatpush1.bf16.msra.mxu0 0
    %882 = vmatprep.subr.bf16.mxu0 0
    %883 = vmatpush1.bf16.msra.mxu0 0
    %884 = vmatprep.subr.bf16.mxu0 0
    %885 = vmatpush1.bf16.msra.mxu0 0
    %886 = vmatprep.subr.bf16.mxu0 0
    %887 = vmatpush1.bf16.msra.mxu0 0
    %888 = vmatprep.subr.bf16.mxu0 0
    %889 = vmatpush1.bf16.msra.mxu0 0
    %890 = vmatprep.subr.bf16.mxu0 0
    %891 = vmatpush1.bf16.msra.mxu0 0
    %892 = vmatprep.subr.bf16.mxu0 0
    %893 = vmatpush1.bf16.msra.mxu0 0
    %894 = vmatprep.subr.bf16.mxu0 0
    %895 = vmatpush1.bf16.msra.mxu0 0
    %896 = vmatprep.mubr.bf16.mxu0 0
    %897 = vmatmul.mubr.bf16.gmra.mrb[0].mxu0 %v862
    %v898 = vpop.f32.mrb[0].mxu0
    %v899 = vadd.f32 %v836, %v898
    %v900 = vpop.f32.mrb[0].mxu0
    %v901 = vpop.f32.mrb[0].mxu0
    %v902 = vpop.f32.mrb[0].mxu0
    %903 = vdwg.mxu0
    %v904 = vmax.f32 %v899, 0.0
    %v905 = vpack.c.bf16 %v904, %v904
    %v906 = vld [vmem:[%s5] sm:$0xf]
    %v907 = vld [vmem:[%s5 + $0x4] sm:$0xf]
    %v908 = vld [vmem:[%s5 + $0x8] sm:$0xf]
    %v909 = vld [vmem:[%s5 + $0xc] sm:$0xf]
    %v910 = vld [vmem:[%s5 + $0x10] sm:$0xf]
    %v911 = vld [vmem:[%s5 + $0x14] sm:$0xf]
    %v912 = vld [vmem:[%s5 + $0x18] sm:$0xf]
    %v913 = vld [vmem:[%s5 + $0x1c] sm:$0xf]
    %v914 = vld [vmem:[%s6 + $0x8] sm:$0x1]
    %v915 = vlaneseq
    %v916 = vshrl.u32 %v915, 7
    %v917 = vsub.s32 0, %v916
    %v918 = vrot.slane %v914, %v917
    %v927 = vunpack.c.l.b16 %v906
    %v928 = vunpack.c.l.b16 %v907
    %v929 = vunpack.c.l.b16 %v908
    %v930 = vunpack.c.l.b16 %v909
    %v931 = vunpack.c.l.b16 %v910
    %v932 = vunpack.c.l.b16 %v911
    %v933 = vunpack.c.l.b16 %v912
    %v934 = vunpack.c.l.b16 %v913
    %v935 = vpack.c.b16 %v928, %v927
    %v936 = vpack.c.b16 %v930, %v929
    %v937 = vpack.c.b16 %v932, %v931
    %v938 = vpack.c.b16 %v934, %v933
    %v944 = vsel %vm447, %v905, 0
    %946 = vmatprep.subr.bf16.mxu0 0
    %947 = vmatpush1.bf16.msra.mxu0 %v935
    %948 = vmatprep.subr.bf16.mxu0 0
    %949 = vmatpush1.bf16.msra.mxu0 %v936
    %950 = vmatprep.subr.bf16.mxu0 0
    %951 = vmatpush1.bf16.msra.mxu0 %v937
    %952 = vmatprep.subr.bf16.mxu0 0
    %953 = vmatpush1.bf16.msra.mxu0 %v938
    %954 = vmatprep.subr.bf16.mxu0 0
    %955 = vmatpush1.bf16.msra.mxu0 0
    %956 = vmatprep.subr.bf16.mxu0 0
    %957 = vmatpush1.bf16.msra.mxu0 0
    %958 = vmatprep.subr.bf16.mxu0 0
    %959 = vmatpush1.bf16.msra.mxu0 0
    %960 = vmatprep.subr.bf16.mxu0 0
    %961 = vmatpush1.bf16.msra.mxu0 0
    %962 = vmatprep.subr.bf16.mxu0 0
    %963 = vmatpush1.bf16.msra.mxu0 0
    %964 = vmatprep.subr.bf16.mxu0 0
    %965 = vmatpush1.bf16.msra.mxu0 0
    %966 = vmatprep.subr.bf16.mxu0 0
    %967 = vmatpush1.bf16.msra.mxu0 0
    %968 = vmatprep.subr.bf16.mxu0 0
    %969 = vmatpush1.bf16.msra.mxu0 0
    %970 = vmatprep.subr.bf16.mxu0 0
    %971 = vmatpush1.bf16.msra.mxu0 0
    %972 = vmatprep.subr.bf16.mxu0 0
    %973 = vmatpush1.bf16.msra.mxu0 0
    %974 = vmatprep.subr.bf16.mxu0 0
    %975 = vmatpush1.bf16.msra.mxu0 0
    %976 = vmatprep.subr.bf16.mxu0 0
    %977 = vmatpush1.bf16.msra.mxu0 0
    %978 = vmatprep.mubr.bf16.mxu0 0
    %979 = vmatmul.mubr.bf16.gmra.mrb[0].mxu0 %v944
    %v980 = vpop.f32.mrb[0].mxu0
    %v981 = vadd.f32 %v918, %v980
    %v982 = vpop.f32.mrb[0].mxu0
    %v983 = vpop.f32.mrb[0].mxu0
    %v984 = vpop.f32.mrb[0].mxu0
    %985 = vdwg.mxu0
    %986 = vst [vmem:[#allocation2] sm:$0x3] %v981
    // Predicated region
    $region30: #{attend_approximator_forward.1} parent=1 // pred_check
      _
    $region31: #{attend_approximator_forward.1} parent=1 // pred_check_branch
      %988 = sbr.rel (0) target = $region33
    $region32: #{attend_approximator_forward.1} parent=1 // pred_region
      %s990 = ssub.s32 32, 32
      %991 = vsyncadd [#allocation3], %s990
      %s993 = sshll.u32 [#allocation2], 4
      %s994 = int_to_ptr.vmem [resolvable:$true] %s993
      %996 = dma.vmem_to_hbm [thread:$0]  %s994, 32, %s7, [#allocation3]
    $region33: #{attend_approximator_forward.1} parent=1 // pred_fallthru
      _
    // Predicated region
    $region34: #{attend_approximator_forward.1} parent=1 // pred_check
      _
    $region35: #{attend_approximator_forward.1} parent=1 // pred_check_branch
      %998 = sbr.rel (0) target = $region37
    $region36: #{attend_approximator_forward.1} parent=1 // pred_region
      %999 = dma.done [#allocation3], 32
    $region37: #{attend_approximator_forward.1} parent=1 // pred_fallthru
      _
    %1000 = vsyncpa [#allocation3], 1

</llo_original>
